<compile_context>
chip_gen: v7x
topology: tpu7x:2x2x1
jax: 0.10.0
libtpu: 0.0.40
codegen_flags: <defaults>
</compile_context>

<pallas_src>
import jax
import jax.numpy as jnp
from jax.experimental import pallas as pl
from jax.experimental.pallas import tpu as pltpu


def _layer_sizes(input_size, output_size):
    """Replicates the layer-size construction loop of LinearModel.__init__."""
    sizes = []
    in_sz = input_size
    temp_out = input_size // 16
    while True:
        if temp_out <= output_size:
            sizes.append((in_sz, output_size))
            break
        else:
            sizes.append((in_sz, temp_out))
            in_sz = temp_out
            temp_out = temp_out // 16
    return sizes


def _make_fused_kernel(num_layers):
    """Kernel applying `num_layers` Linear layers back-to-back in registers."""

    def kernel(*refs):
        # refs = (x, w1_t, b1, w2_t, b2, ..., out)
        x_ref = refs[0]
        o_ref = refs[-1]
        h = x_ref[...]                              # (M, K0) f32
        for i in range(num_layers):
            wt_ref = refs[1 + 2 * i]                # (K_i, N_i) pre-transposed
            b_ref = refs[2 + 2 * i]                 # (1, N_i)
            h = jnp.dot(h, wt_ref[...],
                        preferred_element_type=jnp.float32) + b_ref[...]
        o_ref[...] = h.astype(o_ref.dtype)

    return kernel


def linear_model_forward(x, params):
    """Fused forward pass: one pallas_call for the entire Linear chain.

    x:      (M, K0) float32
    params: list of (w_t, b2) with w_t shape (K_i, N_i), b2 shape (1, N_i)
    """
    num_layers = len(params)
    M = x.shape[0]
    N_out = params[-1][0].shape[1]

    flat_params = []
    for (wt, b2) in params:
        flat_params.extend([wt, b2])

    vmem_spec = pl.BlockSpec(memory_space=pltpu.MemorySpace.VMEM)

    return pl.pallas_call(
        _make_fused_kernel(num_layers),
        out_shape=jax.ShapeDtypeStruct((M, N_out), jnp.float32),
        in_specs=[vmem_spec] * (1 + 2 * num_layers),
        out_specs=vmem_spec,
    )(x, *flat_params)


def build_linear_model_params(input_size, output_size, key):
    """Builds params in kernel-ready layout: (w_t (K,N), b (1,N)) per layer.

    Uses torch.nn.Linear default init U(-1/sqrt(fan_in), 1/sqrt(fan_in)).
    The transpose to (K, N) is done ONCE here, not on the forward path.
    """
    params = []
    for (fan_in, fan_out) in _layer_sizes(input_size, output_size):
        key, kw, kb = jax.random.split(key, 3)
        bound = 1.0 / (fan_in ** 0.5)
        w = jax.random.uniform(kw, (fan_out, fan_in), jnp.float32,
                               minval=-bound, maxval=bound)
        b = jax.random.uniform(kb, (fan_out,), jnp.float32,
                               minval=-bound, maxval=bound)
        params.append((jnp.transpose(w), b.reshape(1, fan_out)))
    return params


if __name__ == "__main__":
    key = jax.random.PRNGKey(0)
    batch = 8
    input_size = 1024
    output_size = 16

    key, kx = jax.random.split(key)
    x = jax.random.normal(kx, (batch, input_size), jnp.float32)

    params = build_linear_model_params(input_size, output_size, key)

    y = linear_model_forward(x, params)
    jax.block_until_ready(y)

    # sanity check against a plain-JAX reference of the same chain
    y_ref = x
    for (wt, b2) in params:
        y_ref = y_ref @ wt + b2

    assert y.shape == (batch, output_size)
    assert jnp.allclose(y, y_ref, atol=1e-4, rtol=1e-4)

    print("KERNEL_OK")
</pallas_src>

<mosaic_0001>
module attributes {stable_mosaic.version = 11 : i64} {
  func.func @kernel(%arg0: memref<8x1024xf32, #tpu.memory_space<vmem>>, %arg1: memref<1024x64xf32, #tpu.memory_space<vmem>>, %arg2: memref<1x64xf32, #tpu.memory_space<vmem>>, %arg3: memref<64x16xf32, #tpu.memory_space<vmem>>, %arg4: memref<1x16xf32, #tpu.memory_space<vmem>>, %arg5: memref<8x16xf32, #tpu.memory_space<vmem>>) attributes {dimension_semantics = [], scalar_prefetch = 0 : i64, scratch_operands = 0 : i64, tpu.core_type = #tpu.core_type<tc>} {
    %c0 = arith.constant 0 : index
    %c0_0 = arith.constant 0 : index
    %0 = vector.load %arg0[%c0, %c0_0] : memref<8x1024xf32, #tpu.memory_space<vmem>>, vector<8x1024xf32>
    %c0_1 = arith.constant 0 : index
    %c0_2 = arith.constant 0 : index
    %1 = vector.load %arg1[%c0_1, %c0_2] : memref<1024x64xf32, #tpu.memory_space<vmem>>, vector<1024x64xf32>
    %cst = arith.constant dense<0.000000e+00> : vector<8x64xf32>
    %2 = tpu.matmul %0, %1, %cst {dimension_numbers = #tpu.dot_dimension_numbers<[1], [0], [0], [1], [0, 0, 1, 1], [], []>} : vector<8x1024xf32>, vector<1024x64xf32>, vector<8x64xf32> -> vector<8x64xf32>
    %c0_3 = arith.constant 0 : index
    %c0_4 = arith.constant 0 : index
    %3 = vector.load %arg2[%c0_3, %c0_4] : memref<1x64xf32, #tpu.memory_space<vmem>>, vector<1x64xf32>
    %4 = vector.broadcast %3 : vector<1x64xf32> to vector<8x64xf32>
    %5 = arith.addf %2, %4 : vector<8x64xf32>
    %c0_5 = arith.constant 0 : index
    %c0_6 = arith.constant 0 : index
    %6 = vector.load %arg3[%c0_5, %c0_6] : memref<64x16xf32, #tpu.memory_space<vmem>>, vector<64x16xf32>
    %cst_7 = arith.constant dense<0.000000e+00> : vector<8x16xf32>
    %7 = tpu.matmul %5, %6, %cst_7 {dimension_numbers = #tpu.dot_dimension_numbers<[1], [0], [0], [1], [0, 0, 1, 1], [], []>} : vector<8x64xf32>, vector<64x16xf32>, vector<8x16xf32> -> vector<8x16xf32>
    %c0_8 = arith.constant 0 : index
    %c0_9 = arith.constant 0 : index
    %8 = vector.load %arg4[%c0_8, %c0_9] : memref<1x16xf32, #tpu.memory_space<vmem>>, vector<1x16xf32>
    %9 = vector.broadcast %8 : vector<1x16xf32> to vector<8x16xf32>
    %10 = arith.addf %7, %9 : vector<8x16xf32>
    %c0_10 = arith.constant 0 : index
    %c0_11 = arith.constant 0 : index
    %11 = vector.load %arg5[%c0_10, %c0_11] : memref<8x16xf32, #tpu.memory_space<vmem>>, vector<8x16xf32>
    tpu.vector_store %arg5[%c0_10, %c0_11], %10 {strides = array<i32>} : memref<8x16xf32, #tpu.memory_space<vmem>>, vector<8x16xf32>,
    return
  }
}

</mosaic_0001>

<llo_original>
// kernel: tpu_custom_call.1
$region0: #{tpu_custom_call.1}
  #allocation0 [shape = 'u32[]', space=smem, size = 0x4, offset = 0x4, fixed_abs, tag = 'smem constant byte address 0x4 - core index']
  #allocation1 [shape = 'u32[144,128]{1,0:T(1,128)}', space=vmem, size = 0x12000, scoped, tag = 'internal scratch']
  %s0 = inlined_call_operand.vmem [shape: f32[8,1024], index: 0, kind: input, shape index: {}]
  %s1 = inlined_call_operand.vmem [shape: f32[1024,64], index: 1, kind: input, shape index: {}]
  %s2 = inlined_call_operand.vmem [shape: f32[1,64], index: 2, kind: input, shape index: {}]
  %s3 = inlined_call_operand.vmem [shape: f32[64,16], index: 3, kind: input, shape index: {}]
  %s4 = inlined_call_operand.vmem [shape: f32[1,16], index: 4, kind: input, shape index: {}]
  %s5 = inlined_call_operand.hbm [shape: f32[8,16], index: 5, kind: output, shape index: {}]
  %s6 = sld [smem:[#allocation0]]
  $region30: #{tpu_custom_call.1} parent=0
    _
  %s8 = ssub.s32 1, %s6
  %s9 = scalar_select 0, %s8, %s6
  $region1: #{tpu_custom_call.1} parent=0
    #allocation2 [shape = 'u8[4096]{0}', space=vmem, size = 0x1000, scoped, tag = 'output window, operand 0, single buffered']
    #allocation3 [shape = 's32[1]{0}', space=sflag, size = 0x4, scoped, tag = 'scoped memory for tpu_custom_call.1']
    %10 = vsyncpa [#allocation3], 0
    // Predicated region
    $region2: #{tpu_custom_call.1} parent=1 // pred_check
      _
    $region3: #{tpu_custom_call.1} parent=1 // pred_check_branch
      %12 = sbr.rel (0) target = $region5
    $region4: #{tpu_custom_call.1} parent=1 // pred_region
      _
    $region5: #{tpu_custom_call.1} parent=1 // pred_fallthru
      _
    // Predicated region
    $region6: #{tpu_custom_call.1} parent=1 // pred_check
      _
    $region7: #{tpu_custom_call.1} parent=1 // pred_check_branch
      %14 = sbr.rel (0) target = $region9
    $region8: #{tpu_custom_call.1} parent=1 // pred_region
      _
    $region9: #{tpu_custom_call.1} parent=1 // pred_fallthru
      _
    // Predicated region
    $region10: #{tpu_custom_call.1} parent=1 // pred_check
      _
    $region11: #{tpu_custom_call.1} parent=1 // pred_check_branch
      %16 = sbr.rel (0) target = $region13
    $region12: #{tpu_custom_call.1} parent=1 // pred_region
      _
    $region13: #{tpu_custom_call.1} parent=1 // pred_fallthru
      _
    // Predicated region
    $region14: #{tpu_custom_call.1} parent=1 // pred_check
      _
    $region15: #{tpu_custom_call.1} parent=1 // pred_check_branch
      %18 = sbr.rel (0) target = $region17
    $region16: #{tpu_custom_call.1} parent=1 // pred_region
      _
    $region17: #{tpu_custom_call.1} parent=1 // pred_fallthru
      _
    // Predicated region
    $region18: #{tpu_custom_call.1} parent=1 // pred_check
      _
    $region19: #{tpu_custom_call.1} parent=1 // pred_check_branch
      %20 = sbr.rel (0) target = $region21
    $region20: #{tpu_custom_call.1} parent=1 // pred_region
      _
    $region21: #{tpu_custom_call.1} parent=1 // pred_fallthru
      _
    %v21 = vld [vmem:[%s0] sm:$0xff]
    %v22 = vld [vmem:[%s0 + $0x8] sm:$0xff]
    %v23 = vld [vmem:[%s0 + $0x10] sm:$0xff]
    %v24 = vld [vmem:[%s0 + $0x18] sm:$0xff]
    %v25 = vld [vmem:[%s0 + $0x20] sm:$0xff]
    %v26 = vld [vmem:[%s0 + $0x28] sm:$0xff]
    %v27 = vld [vmem:[%s0 + $0x30] sm:$0xff]
    %v28 = vld [vmem:[%s0 + $0x38] sm:$0xff]
    %v29 = vld [vmem:[%s1] sm:$0xff]
    %v30 = vld [vmem:[%s1 + $0x8] sm:$0xff]
    %v31 = vld [vmem:[%s1 + $0x10] sm:$0xff]
    %v32 = vld [vmem:[%s1 + $0x18] sm:$0xff]
    %v33 = vld [vmem:[%s1 + $0x20] sm:$0xff]
    %v34 = vld [vmem:[%s1 + $0x28] sm:$0xff]
    %v35 = vld [vmem:[%s1 + $0x30] sm:$0xff]
    %v36 = vld [vmem:[%s1 + $0x38] sm:$0xff]
    %v37 = vld [vmem:[%s1 + $0x40] sm:$0xff]
    %v38 = vld [vmem:[%s1 + $0x48] sm:$0xff]
    %v39 = vld [vmem:[%s1 + $0x50] sm:$0xff]
    %v40 = vld [vmem:[%s1 + $0x58] sm:$0xff]
    %v41 = vld [vmem:[%s1 + $0x60] sm:$0xff]
    %v42 = vld [vmem:[%s1 + $0x68] sm:$0xff]
    %v43 = vld [vmem:[%s1 + $0x70] sm:$0xff]
    %v44 = vld [vmem:[%s1 + $0x78] sm:$0xff]
    %v45 = vld [vmem:[%s1 + $0x80] sm:$0xff]
    %v46 = vld [vmem:[%s1 + $0x88] sm:$0xff]
    %v47 = vld [vmem:[%s1 + $0x90] sm:$0xff]
    %v48 = vld [vmem:[%s1 + $0x98] sm:$0xff]
    %v49 = vld [vmem:[%s1 + $0xa0] sm:$0xff]
    %v50 = vld [vmem:[%s1 + $0xa8] sm:$0xff]
    %v51 = vld [vmem:[%s1 + $0xb0] sm:$0xff]
    %v52 = vld [vmem:[%s1 + $0xb8] sm:$0xff]
    %v53 = vld [vmem:[%s1 + $0xc0] sm:$0xff]
    %v54 = vld [vmem:[%s1 + $0xc8] sm:$0xff]
    %v55 = vld [vmem:[%s1 + $0xd0] sm:$0xff]
    %v56 = vld [vmem:[%s1 + $0xd8] sm:$0xff]
    %v57 = vld [vmem:[%s1 + $0xe0] sm:$0xff]
    %v58 = vld [vmem:[%s1 + $0xe8] sm:$0xff]
    %v59 = vld [vmem:[%s1 + $0xf0] sm:$0xff]
    %v60 = vld [vmem:[%s1 + $0xf8] sm:$0xff]
    %v61 = vld [vmem:[%s1 + $0x100] sm:$0xff]
    %v62 = vld [vmem:[%s1 + $0x108] sm:$0xff]
    %v63 = vld [vmem:[%s1 + $0x110] sm:$0xff]
    %v64 = vld [vmem:[%s1 + $0x118] sm:$0xff]
    %v65 = vld [vmem:[%s1 + $0x120] sm:$0xff]
    %v66 = vld [vmem:[%s1 + $0x128] sm:$0xff]
    %v67 = vld [vmem:[%s1 + $0x130] sm:$0xff]
    %v68 = vld [vmem:[%s1 + $0x138] sm:$0xff]
    %v69 = vld [vmem:[%s1 + $0x140] sm:$0xff]
    %v70 = vld [vmem:[%s1 + $0x148] sm:$0xff]
    %v71 = vld [vmem:[%s1 + $0x150] sm:$0xff]
    %v72 = vld [vmem:[%s1 + $0x158] sm:$0xff]
    %v73 = vld [vmem:[%s1 + $0x160] sm:$0xff]
    %v74 = vld [vmem:[%s1 + $0x168] sm:$0xff]
    %v75 = vld [vmem:[%s1 + $0x170] sm:$0xff]
    %v76 = vld [vmem:[%s1 + $0x178] sm:$0xff]
    %v77 = vld [vmem:[%s1 + $0x180] sm:$0xff]
    %v78 = vld [vmem:[%s1 + $0x188] sm:$0xff]
    %v79 = vld [vmem:[%s1 + $0x190] sm:$0xff]
    %v80 = vld [vmem:[%s1 + $0x198] sm:$0xff]
    %v81 = vld [vmem:[%s1 + $0x1a0] sm:$0xff]
    %v82 = vld [vmem:[%s1 + $0x1a8] sm:$0xff]
    %v83 = vld [vmem:[%s1 + $0x1b0] sm:$0xff]
    %v84 = vld [vmem:[%s1 + $0x1b8] sm:$0xff]
    %v85 = vld [vmem:[%s1 + $0x1c0] sm:$0xff]
    %v86 = vld [vmem:[%s1 + $0x1c8] sm:$0xff]
    %v87 = vld [vmem:[%s1 + $0x1d0] sm:$0xff]
    %v88 = vld [vmem:[%s1 + $0x1d8] sm:$0xff]
    %v89 = vld [vmem:[%s1 + $0x1e0] sm:$0xff]
    %v90 = vld [vmem:[%s1 + $0x1e8] sm:$0xff]
    %v91 = vld [vmem:[%s1 + $0x1f0] sm:$0xff]
    %v92 = vld [vmem:[%s1 + $0x1f8] sm:$0xff]
    %v93 = vld [vmem:[%s1 + $0x200] sm:$0xff]
    %v94 = vld [vmem:[%s1 + $0x208] sm:$0xff]
    %v95 = vld [vmem:[%s1 + $0x210] sm:$0xff]
    %v96 = vld [vmem:[%s1 + $0x218] sm:$0xff]
    %v97 = vld [vmem:[%s1 + $0x220] sm:$0xff]
    %v98 = vld [vmem:[%s1 + $0x228] sm:$0xff]
    %v99 = vld [vmem:[%s1 + $0x230] sm:$0xff]
    %v100 = vld [vmem:[%s1 + $0x238] sm:$0xff]
    %v101 = vld [vmem:[%s1 + $0x240] sm:$0xff]
    %v102 = vld [vmem:[%s1 + $0x248] sm:$0xff]
    %v103 = vld [vmem:[%s1 + $0x250] sm:$0xff]
    %v104 = vld [vmem:[%s1 + $0x258] sm:$0xff]
    %v105 = vld [vmem:[%s1 + $0x260] sm:$0xff]
    %v106 = vld [vmem:[%s1 + $0x268] sm:$0xff]
    %v107 = vld [vmem:[%s1 + $0x270] sm:$0xff]
    %v108 = vld [vmem:[%s1 + $0x278] sm:$0xff]
    %v109 = vld [vmem:[%s1 + $0x280] sm:$0xff]
    %v110 = vld [vmem:[%s1 + $0x288] sm:$0xff]
    %v111 = vld [vmem:[%s1 + $0x290] sm:$0xff]
    %v112 = vld [vmem:[%s1 + $0x298] sm:$0xff]
    %v113 = vld [vmem:[%s1 + $0x2a0] sm:$0xff]
    %v114 = vld [vmem:[%s1 + $0x2a8] sm:$0xff]
    %v115 = vld [vmem:[%s1 + $0x2b0] sm:$0xff]
    %v116 = vld [vmem:[%s1 + $0x2b8] sm:$0xff]
    %v117 = vld [vmem:[%s1 + $0x2c0] sm:$0xff]
    %v118 = vld [vmem:[%s1 + $0x2c8] sm:$0xff]
    %v119 = vld [vmem:[%s1 + $0x2d0] sm:$0xff]
    %v120 = vld [vmem:[%s1 + $0x2d8] sm:$0xff]
    %v121 = vld [vmem:[%s1 + $0x2e0] sm:$0xff]
    %v122 = vld [vmem:[%s1 + $0x2e8] sm:$0xff]
    %v123 = vld [vmem:[%s1 + $0x2f0] sm:$0xff]
    %v124 = vld [vmem:[%s1 + $0x2f8] sm:$0xff]
    %v125 = vld [vmem:[%s1 + $0x300] sm:$0xff]
    %v126 = vld [vmem:[%s1 + $0x308] sm:$0xff]
    %v127 = vld [vmem:[%s1 + $0x310] sm:$0xff]
    %v128 = vld [vmem:[%s1 + $0x318] sm:$0xff]
    %v129 = vld [vmem:[%s1 + $0x320] sm:$0xff]
    %v130 = vld [vmem:[%s1 + $0x328] sm:$0xff]
    %v131 = vld [vmem:[%s1 + $0x330] sm:$0xff]
    %v132 = vld [vmem:[%s1 + $0x338] sm:$0xff]
    %v133 = vld [vmem:[%s1 + $0x340] sm:$0xff]
    %v134 = vld [vmem:[%s1 + $0x348] sm:$0xff]
    %v135 = vld [vmem:[%s1 + $0x350] sm:$0xff]
    %v136 = vld [vmem:[%s1 + $0x358] sm:$0xff]
    %v137 = vld [vmem:[%s1 + $0x360] sm:$0xff]
    %v138 = vld [vmem:[%s1 + $0x368] sm:$0xff]
    %v139 = vld [vmem:[%s1 + $0x370] sm:$0xff]
    %v140 = vld [vmem:[%s1 + $0x378] sm:$0xff]
    %v141 = vld [vmem:[%s1 + $0x380] sm:$0xff]
    %v142 = vld [vmem:[%s1 + $0x388] sm:$0xff]
    %v143 = vld [vmem:[%s1 + $0x390] sm:$0xff]
    %v144 = vld [vmem:[%s1 + $0x398] sm:$0xff]
    %v145 = vld [vmem:[%s1 + $0x3a0] sm:$0xff]
    %v146 = vld [vmem:[%s1 + $0x3a8] sm:$0xff]
    %v147 = vld [vmem:[%s1 + $0x3b0] sm:$0xff]
    %v148 = vld [vmem:[%s1 + $0x3b8] sm:$0xff]
    %v149 = vld [vmem:[%s1 + $0x3c0] sm:$0xff]
    %v150 = vld [vmem:[%s1 + $0x3c8] sm:$0xff]
    %v151 = vld [vmem:[%s1 + $0x3d0] sm:$0xff]
    %v152 = vld [vmem:[%s1 + $0x3d8] sm:$0xff]
    %v153 = vld [vmem:[%s1 + $0x3e0] sm:$0xff]
    %v154 = vld [vmem:[%s1 + $0x3e8] sm:$0xff]
    %v155 = vld [vmem:[%s1 + $0x3f0] sm:$0xff]
    %v156 = vld [vmem:[%s1 + $0x3f8] sm:$0xff]
    %v157 = vld [vmem:[%s2] sm:$0x1]
    %v159 = vlaneseq
    %v160 = vshrl.u32 %v159, 7
    %v161 = vsub.s32 0, %v160
    %v162 = vrot.slane %v157, %v161
    %164 = vmatprep.subr.mxu0 0.0
    %165 = vmatpush1.msra.mxu0 %v29
    %166 = vmatprep.subr.mxu0 0.0
    %167 = vmatpush1.msra.mxu0 %v30
    %168 = vmatprep.subr.mxu0 0.0
    %169 = vmatpush1.msra.mxu0 %v31
    %170 = vmatprep.subr.mxu0 0.0
    %171 = vmatpush1.msra.mxu0 %v32
    %172 = vmatprep.subr.mxu0 0.0
    %173 = vmatpush1.msra.mxu0 %v33
    %174 = vmatprep.subr.mxu0 0.0
    %175 = vmatpush1.msra.mxu0 %v34
    %176 = vmatprep.subr.mxu0 0.0
    %177 = vmatpush1.msra.mxu0 %v35
    %178 = vmatprep.subr.mxu0 0.0
    %179 = vmatpush1.msra.mxu0 %v36
    %180 = vmatprep.subr.mxu0 0.0
    %181 = vmatpush1.msra.mxu0 %v37
    %182 = vmatprep.subr.mxu0 0.0
    %183 = vmatpush1.msra.mxu0 %v38
    %184 = vmatprep.subr.mxu0 0.0
    %185 = vmatpush1.msra.mxu0 %v39
    %186 = vmatprep.subr.mxu0 0.0
    %187 = vmatpush1.msra.mxu0 %v40
    %188 = vmatprep.subr.mxu0 0.0
    %189 = vmatpush1.msra.mxu0 %v41
    %190 = vmatprep.subr.mxu0 0.0
    %191 = vmatpush1.msra.mxu0 %v42
    %192 = vmatprep.subr.mxu0 0.0
    %193 = vmatpush1.msra.mxu0 %v43
    %194 = vmatprep.subr.mxu0 0.0
    %195 = vmatpush1.msra.mxu0 %v44
    %196 = vmatprep.subr.mxu0 0.0
    %197 = vmatpush1.msra.mxu0 %v45
    %198 = vmatprep.subr.mxu0 0.0
    %199 = vmatpush1.msra.mxu0 %v46
    %200 = vmatprep.subr.mxu0 0.0
    %201 = vmatpush1.msra.mxu0 %v47
    %202 = vmatprep.subr.mxu0 0.0
    %203 = vmatpush1.msra.mxu0 %v48
    %204 = vmatprep.subr.mxu0 0.0
    %205 = vmatpush1.msra.mxu0 %v49
    %206 = vmatprep.subr.mxu0 0.0
    %207 = vmatpush1.msra.mxu0 %v50
    %208 = vmatprep.subr.mxu0 0.0
    %209 = vmatpush1.msra.mxu0 %v51
    %210 = vmatprep.subr.mxu0 0.0
    %211 = vmatpush1.msra.mxu0 %v52
    %212 = vmatprep.subr.mxu0 0.0
    %213 = vmatpush1.msra.mxu0 %v53
    %214 = vmatprep.subr.mxu0 0.0
    %215 = vmatpush1.msra.mxu0 %v54
    %216 = vmatprep.subr.mxu0 0.0
    %217 = vmatpush1.msra.mxu0 %v55
    %218 = vmatprep.subr.mxu0 0.0
    %219 = vmatpush1.msra.mxu0 %v56
    %220 = vmatprep.subr.mxu0 0.0
    %221 = vmatpush1.msra.mxu0 %v57
    %222 = vmatprep.subr.mxu0 0.0
    %223 = vmatpush1.msra.mxu0 %v58
    %224 = vmatprep.subr.mxu0 0.0
    %225 = vmatpush1.msra.mxu0 %v59
    %226 = vmatprep.subr.mxu0 0.0
    %227 = vmatpush1.msra.mxu0 %v60
    %228 = vmatprep.mubr.f32.mxu0 %v22
    %229 = vmatmul.mubr.f32.gmra.mrb[0].mxu0 %v21
    %v230 = vpop.f32.mrb[0].mxu0
    %v231 = vadd.f32 %v162, %v230
    %v232 = vpop.f32.mrb[0].mxu0
    %233 = vdwg.mxu0
    %234 = vmatprep.subr.mxu0 0.0
    %235 = vmatpush1.msra.mxu0 %v61
    %236 = vmatprep.subr.mxu0 0.0
    %237 = vmatpush1.msra.mxu0 %v62
    %238 = vmatprep.subr.mxu0 0.0
    %239 = vmatpush1.msra.mxu0 %v63
    %240 = vmatprep.subr.mxu0 0.0
    %241 = vmatpush1.msra.mxu0 %v64
    %242 = vmatprep.subr.mxu0 0.0
    %243 = vmatpush1.msra.mxu0 %v65
    %244 = vmatprep.subr.mxu0 0.0
    %245 = vmatpush1.msra.mxu0 %v66
    %246 = vmatprep.subr.mxu0 0.0
    %247 = vmatpush1.msra.mxu0 %v67
    %248 = vmatprep.subr.mxu0 0.0
    %249 = vmatpush1.msra.mxu0 %v68
    %250 = vmatprep.subr.mxu0 0.0
    %251 = vmatpush1.msra.mxu0 %v69
    %252 = vmatprep.subr.mxu0 0.0
    %253 = vmatpush1.msra.mxu0 %v70
    %254 = vmatprep.subr.mxu0 0.0
    %255 = vmatpush1.msra.mxu0 %v71
    %256 = vmatprep.subr.mxu0 0.0
    %257 = vmatpush1.msra.mxu0 %v72
    %258 = vmatprep.subr.mxu0 0.0
    %259 = vmatpush1.msra.mxu0 %v73
    %260 = vmatprep.subr.mxu0 0.0
    %261 = vmatpush1.msra.mxu0 %v74
    %262 = vmatprep.subr.mxu0 0.0
    %263 = vmatpush1.msra.mxu0 %v75
    %264 = vmatprep.subr.mxu0 0.0
    %265 = vmatpush1.msra.mxu0 %v76
    %266 = vmatprep.subr.mxu0 0.0
    %267 = vmatpush1.msra.mxu0 %v77
    %268 = vmatprep.subr.mxu0 0.0
    %269 = vmatpush1.msra.mxu0 %v78
    %270 = vmatprep.subr.mxu0 0.0
    %271 = vmatpush1.msra.mxu0 %v79
    %272 = vmatprep.subr.mxu0 0.0
    %273 = vmatpush1.msra.mxu0 %v80
    %274 = vmatprep.subr.mxu0 0.0
    %275 = vmatpush1.msra.mxu0 %v81
    %276 = vmatprep.subr.mxu0 0.0
    %277 = vmatpush1.msra.mxu0 %v82
    %278 = vmatprep.subr.mxu0 0.0
    %279 = vmatpush1.msra.mxu0 %v83
    %280 = vmatprep.subr.mxu0 0.0
    %281 = vmatpush1.msra.mxu0 %v84
    %282 = vmatprep.subr.mxu0 0.0
    %283 = vmatpush1.msra.mxu0 %v85
    %284 = vmatprep.subr.mxu0 0.0
    %285 = vmatpush1.msra.mxu0 %v86
    %286 = vmatprep.subr.mxu0 0.0
    %287 = vmatpush1.msra.mxu0 %v87
    %288 = vmatprep.subr.mxu0 0.0
    %289 = vmatpush1.msra.mxu0 %v88
    %290 = vmatprep.subr.mxu0 0.0
    %291 = vmatpush1.msra.mxu0 %v89
    %292 = vmatprep.subr.mxu0 0.0
    %293 = vmatpush1.msra.mxu0 %v90
    %294 = vmatprep.subr.mxu0 0.0
    %295 = vmatpush1.msra.mxu0 %v91
    %296 = vmatprep.subr.mxu0 0.0
    %297 = vmatpush1.msra.mxu0 %v92
    %298 = vmatprep.mubr.f32.mxu0 %v24
    %299 = vmatmul.mubr.f32.gmra.mrb[0].mxu0 %v23
    %v300 = vpop.f32.mrb[0].mxu0
    %v301 = vadd.f32 %v231, %v300
    %v302 = vpop.f32.mrb[0].mxu0
    %303 = vdwg.mxu0
    %304 = vmatprep.subr.mxu0 0.0
    %305 = vmatpush1.msra.mxu0 %v93
    %306 = vmatprep.subr.mxu0 0.0
    %307 = vmatpush1.msra.mxu0 %v94
    %308 = vmatprep.subr.mxu0 0.0
    %309 = vmatpush1.msra.mxu0 %v95
    %310 = vmatprep.subr.mxu0 0.0
    %311 = vmatpush1.msra.mxu0 %v96
    %312 = vmatprep.subr.mxu0 0.0
    %313 = vmatpush1.msra.mxu0 %v97
    %314 = vmatprep.subr.mxu0 0.0
    %315 = vmatpush1.msra.mxu0 %v98
    %316 = vmatprep.subr.mxu0 0.0
    %317 = vmatpush1.msra.mxu0 %v99
    %318 = vmatprep.subr.mxu0 0.0
    %319 = vmatpush1.msra.mxu0 %v100
    %320 = vmatprep.subr.mxu0 0.0
    %321 = vmatpush1.msra.mxu0 %v101
    %322 = vmatprep.subr.mxu0 0.0
    %323 = vmatpush1.msra.mxu0 %v102
    %324 = vmatprep.subr.mxu0 0.0
    %325 = vmatpush1.msra.mxu0 %v103
    %326 = vmatprep.subr.mxu0 0.0
    %327 = vmatpush1.msra.mxu0 %v104
    %328 = vmatprep.subr.mxu0 0.0
    %329 = vmatpush1.msra.mxu0 %v105
    %330 = vmatprep.subr.mxu0 0.0
    %331 = vmatpush1.msra.mxu0 %v106
    %332 = vmatprep.subr.mxu0 0.0
    %333 = vmatpush1.msra.mxu0 %v107
    %334 = vmatprep.subr.mxu0 0.0
    %335 = vmatpush1.msra.mxu0 %v108
    %336 = vmatprep.subr.mxu0 0.0
    %337 = vmatpush1.msra.mxu0 %v109
    %338 = vmatprep.subr.mxu0 0.0
    %339 = vmatpush1.msra.mxu0 %v110
    %340 = vmatprep.subr.mxu0 0.0
    %341 = vmatpush1.msra.mxu0 %v111
    %342 = vmatprep.subr.mxu0 0.0
    %343 = vmatpush1.msra.mxu0 %v112
    %344 = vmatprep.subr.mxu0 0.0
    %345 = vmatpush1.msra.mxu0 %v113
    %346 = vmatprep.subr.mxu0 0.0
    %347 = vmatpush1.msra.mxu0 %v114
    %348 = vmatprep.subr.mxu0 0.0
    %349 = vmatpush1.msra.mxu0 %v115
    %350 = vmatprep.subr.mxu0 0.0
    %351 = vmatpush1.msra.mxu0 %v116
    %352 = vmatprep.subr.mxu0 0.0
    %353 = vmatpush1.msra.mxu0 %v117
    %354 = vmatprep.subr.mxu0 0.0
    %355 = vmatpush1.msra.mxu0 %v118
    %356 = vmatprep.subr.mxu0 0.0
    %357 = vmatpush1.msra.mxu0 %v119
    %358 = vmatprep.subr.mxu0 0.0
    %359 = vmatpush1.msra.mxu0 %v120
    %360 = vmatprep.subr.mxu0 0.0
    %361 = vmatpush1.msra.mxu0 %v121
    %362 = vmatprep.subr.mxu0 0.0
    %363 = vmatpush1.msra.mxu0 %v122
    %364 = vmatprep.subr.mxu0 0.0
    %365 = vmatpush1.msra.mxu0 %v123
    %366 = vmatprep.subr.mxu0 0.0
    %367 = vmatpush1.msra.mxu0 %v124
    %368 = vmatprep.mubr.f32.mxu0 %v26
    %369 = vmatmul.mubr.f32.gmra.mrb[0].mxu0 %v25
    %v370 = vpop.f32.mrb[0].mxu0
    %v371 = vadd.f32 %v301, %v370
    %v372 = vpop.f32.mrb[0].mxu0
    %373 = vdwg.mxu0
    %374 = vmatprep.subr.mxu0 0.0
    %375 = vmatpush1.msra.mxu0 %v125
    %376 = vmatprep.subr.mxu0 0.0
    %377 = vmatpush1.msra.mxu0 %v126
    %378 = vmatprep.subr.mxu0 0.0
    %379 = vmatpush1.msra.mxu0 %v127
    %380 = vmatprep.subr.mxu0 0.0
    %381 = vmatpush1.msra.mxu0 %v128
    %382 = vmatprep.subr.mxu0 0.0
    %383 = vmatpush1.msra.mxu0 %v129
    %384 = vmatprep.subr.mxu0 0.0
    %385 = vmatpush1.msra.mxu0 %v130
    %386 = vmatprep.subr.mxu0 0.0
    %387 = vmatpush1.msra.mxu0 %v131
    %388 = vmatprep.subr.mxu0 0.0
    %389 = vmatpush1.msra.mxu0 %v132
    %390 = vmatprep.subr.mxu0 0.0
    %391 = vmatpush1.msra.mxu0 %v133
    %392 = vmatprep.subr.mxu0 0.0
    %393 = vmatpush1.msra.mxu0 %v134
    %394 = vmatprep.subr.mxu0 0.0
    %395 = vmatpush1.msra.mxu0 %v135
    %396 = vmatprep.subr.mxu0 0.0
    %397 = vmatpush1.msra.mxu0 %v136
    %398 = vmatprep.subr.mxu0 0.0
    %399 = vmatpush1.msra.mxu0 %v137
    %400 = vmatprep.subr.mxu0 0.0
    %401 = vmatpush1.msra.mxu0 %v138
    %402 = vmatprep.subr.mxu0 0.0
    %403 = vmatpush1.msra.mxu0 %v139
    %404 = vmatprep.subr.mxu0 0.0
    %405 = vmatpush1.msra.mxu0 %v140
    %406 = vmatprep.subr.mxu0 0.0
    %407 = vmatpush1.msra.mxu0 %v141
    %408 = vmatprep.subr.mxu0 0.0
    %409 = vmatpush1.msra.mxu0 %v142
    %410 = vmatprep.subr.mxu0 0.0
    %411 = vmatpush1.msra.mxu0 %v143
    %412 = vmatprep.subr.mxu0 0.0
    %413 = vmatpush1.msra.mxu0 %v144
    %414 = vmatprep.subr.mxu0 0.0
    %415 = vmatpush1.msra.mxu0 %v145
    %416 = vmatprep.subr.mxu0 0.0
    %417 = vmatpush1.msra.mxu0 %v146
    %418 = vmatprep.subr.mxu0 0.0
    %419 = vmatpush1.msra.mxu0 %v147
    %420 = vmatprep.subr.mxu0 0.0
    %421 = vmatpush1.msra.mxu0 %v148
    %422 = vmatprep.subr.mxu0 0.0
    %423 = vmatpush1.msra.mxu0 %v149
    %424 = vmatprep.subr.mxu0 0.0
    %425 = vmatpush1.msra.mxu0 %v150
    %426 = vmatprep.subr.mxu0 0.0
    %427 = vmatpush1.msra.mxu0 %v151
    %428 = vmatprep.subr.mxu0 0.0
    %429 = vmatpush1.msra.mxu0 %v152
    %430 = vmatprep.subr.mxu0 0.0
    %431 = vmatpush1.msra.mxu0 %v153
    %432 = vmatprep.subr.mxu0 0.0
    %433 = vmatpush1.msra.mxu0 %v154
    %434 = vmatprep.subr.mxu0 0.0
    %435 = vmatpush1.msra.mxu0 %v155
    %436 = vmatprep.subr.mxu0 0.0
    %437 = vmatpush1.msra.mxu0 %v156
    %438 = vmatprep.mubr.f32.mxu0 %v28
    %439 = vmatmul.mubr.f32.gmra.mrb[0].mxu0 %v27
    %v440 = vpop.f32.mrb[0].mxu0
    %v441 = vadd.f32 %v371, %v440
    %v442 = vpop.f32.mrb[0].mxu0
    %443 = vdwg.mxu0
    %v444 = vld [vmem:[%s3] sm:$0xff]
    %v445 = vld [vmem:[%s3 + $0x8] sm:$0xff]
    %v446 = vld [vmem:[%s3 + $0x10] sm:$0xff]
    %v447 = vld [vmem:[%s3 + $0x18] sm:$0xff]
    %v448 = vld [vmem:[%s3 + $0x20] sm:$0xff]
    %v449 = vld [vmem:[%s3 + $0x28] sm:$0xff]
    %v450 = vld [vmem:[%s3 + $0x30] sm:$0xff]
    %v451 = vld [vmem:[%s3 + $0x38] sm:$0xff]
    %v452 = vld [vmem:[%s4] sm:$0x1]
    %v454 = vlaneseq
    %v455 = vshrl.u32 %v454, 7
    %v456 = vsub.s32 0, %v455
    %v457 = vrot.slane %v452, %v456
    %vm459 = vcmask 523264
    %v461 = vsel %vm459, %v441, 0
    %463 = vmatprep.subr.mxu0 0.0
    %464 = vmatpush1.msra.mxu0 %v444
    %465 = vmatprep.subr.mxu0 0.0
    %466 = vmatpush1.msra.mxu0 %v445
    %467 = vmatprep.subr.mxu0 0.0
    %468 = vmatpush1.msra.mxu0 %v446
    %469 = vmatprep.subr.mxu0 0.0
    %470 = vmatpush1.msra.mxu0 %v447
    %471 = vmatprep.subr.mxu0 0.0
    %472 = vmatpush1.msra.mxu0 %v448
    %473 = vmatprep.subr.mxu0 0.0
    %474 = vmatpush1.msra.mxu0 %v449
    %475 = vmatprep.subr.mxu0 0.0
    %476 = vmatpush1.msra.mxu0 %v450
    %477 = vmatprep.subr.mxu0 0.0
    %478 = vmatpush1.msra.mxu0 %v451
    %479 = vmatprep.subr.mxu0 0.0
    %480 = vmatpush1.msra.mxu0 0.0
    %481 = vmatprep.subr.mxu0 0.0
    %482 = vmatpush1.msra.mxu0 0.0
    %483 = vmatprep.subr.mxu0 0.0
    %484 = vmatpush1.msra.mxu0 0.0
    %485 = vmatprep.subr.mxu0 0.0
    %486 = vmatpush1.msra.mxu0 0.0
    %487 = vmatprep.subr.mxu0 0.0
    %488 = vmatpush1.msra.mxu0 0.0
    %489 = vmatprep.subr.mxu0 0.0
    %490 = vmatpush1.msra.mxu0 0.0
    %491 = vmatprep.subr.mxu0 0.0
    %492 = vmatpush1.msra.mxu0 0.0
    %493 = vmatprep.subr.mxu0 0.0
    %494 = vmatpush1.msra.mxu0 0.0
    %495 = vmatprep.subr.mxu0 0.0
    %496 = vmatpush1.msra.mxu0 0.0
    %497 = vmatprep.subr.mxu0 0.0
    %498 = vmatpush1.msra.mxu0 0.0
    %499 = vmatprep.subr.mxu0 0.0
    %500 = vmatpush1.msra.mxu0 0.0
    %501 = vmatprep.subr.mxu0 0.0
    %502 = vmatpush1.msra.mxu0 0.0
    %503 = vmatprep.subr.mxu0 0.0
    %504 = vmatpush1.msra.mxu0 0.0
    %505 = vmatprep.subr.mxu0 0.0
    %506 = vmatpush1.msra.mxu0 0.0
    %507 = vmatprep.subr.mxu0 0.0
    %508 = vmatpush1.msra.mxu0 0.0
    %509 = vmatprep.subr.mxu0 0.0
    %510 = vmatpush1.msra.mxu0 0.0
    %511 = vmatprep.subr.mxu0 0.0
    %512 = vmatpush1.msra.mxu0 0.0
    %513 = vmatprep.subr.mxu0 0.0
    %514 = vmatpush1.msra.mxu0 0.0
    %515 = vmatprep.subr.mxu0 0.0
    %516 = vmatpush1.msra.mxu0 0.0
    %517 = vmatprep.subr.mxu0 0.0
    %518 = vmatpush1.msra.mxu0 0.0
    %519 = vmatprep.subr.mxu0 0.0
    %520 = vmatpush1.msra.mxu0 0.0
    %521 = vmatprep.subr.mxu0 0.0
    %522 = vmatpush1.msra.mxu0 0.0
    %523 = vmatprep.subr.mxu0 0.0
    %524 = vmatpush1.msra.mxu0 0.0
    %525 = vmatprep.subr.mxu0 0.0
    %526 = vmatpush1.msra.mxu0 0.0
    %527 = vmatprep.mubr.f32.mxu0 0.0
    %528 = vmatmul.mubr.f32.gmra.mrb[0].mxu0 %v461
    %v529 = vpop.f32.mrb[0].mxu0
    %v530 = vadd.f32 %v457, %v529
    %v531 = vpop.f32.mrb[0].mxu0
    %532 = vdwg.mxu0
    %vm533 = vcmask 130048
    %534 = vst.msk [vmem:[#allocation2] sm:$0xff] %vm533, %v530
    // Predicated region
    $region22: #{tpu_custom_call.1} parent=1 // pred_check
      _
    $region23: #{tpu_custom_call.1} parent=1 // pred_check_branch
      %536 = sbr.rel (0) target = $region25
    $region24: #{tpu_custom_call.1} parent=1 // pred_region
      %s538 = ssub.s32 128, 128
      %539 = vsyncadd [#allocation3], %s538
      %s541 = sshll.u32 [#allocation2], 4
      %s542 = int_to_ptr.vmem [resolvable:$true] %s541
      %544 = dma.vmem_to_hbm [thread:$0]  %s542, 128, %s5, [#allocation3]
    $region25: #{tpu_custom_call.1} parent=1 // pred_fallthru
      _
    // Predicated region
    $region26: #{tpu_custom_call.1} parent=1 // pred_check
      _
    $region27: #{tpu_custom_call.1} parent=1 // pred_check_branch
      %546 = sbr.rel (0) target = $region29
    $region28: #{tpu_custom_call.1} parent=1 // pred_region
      %547 = dma.done [#allocation3], 128
    $region29: #{tpu_custom_call.1} parent=1 // pred_fallthru
      _
    %548 = vsyncpa [#allocation3], 1

</llo_original>
